<compile_context>
chip_gen: v7x
topology: tpu7x:2x2x1
jax: 0.10.0
libtpu: 0.0.40
codegen_flags: <defaults>
</compile_context>

<pallas_src>
import jax
import jax.numpy as jnp
from jax.experimental import pallas as pl
from jax.experimental.pallas import tpu as pltpu


def _round_up(n, m):
    return ((n + m - 1) // m) * m


def mlp_kernel(x_ref, w1t_ref, bw_ref, b2_ref, o_ref):
    # Hidden layer: (tB, D) @ (D, Hp) on the MXU, f32 accumulate. W1 is
    # pre-transposed and lane-padded in the wrapper (no in-kernel XLU work).
    h = jnp.dot(x_ref[...], w1t_ref[...], preferred_element_type=jnp.float32)
    bw = bw_ref[...]                                   # (2, Hp): row 0 = b1, row 1 = w2
    h = jnp.maximum(h + bw[0:1, :], 0.0)               # bias + ReLU on the VPU
    # Output layer (out_features == 1): elementwise mul + cross-lane reduce
    # instead of an N=1 MXU matmul.  b2 is an SMEM scalar.
    out = jnp.sum(h * bw[1:2, :], axis=-1, keepdims=True) + b2_ref[0]
    o_ref[...] = out.astype(o_ref.dtype)


def prepare_params(w1, b1, w2, b2):
    """One-time layout prep (hoisted out of the per-call forward path).

    w1: (H, D); b1: (H,); w2: (1, H); b2: (1,)
    Returns (w1t (D, Hp), bw (2, Hp), b2s (1,)) with Hp = 128-lane-padded H.
    Zero padding is exact through bias-add -> ReLU -> reduce.
    """
    H, D = w1.shape
    Hp = _round_up(max(H, 128), 128)
    w1t = jnp.zeros((D, Hp), jnp.float32).at[:, :H].set(w1.T.astype(jnp.float32))
    bw = jnp.zeros((2, Hp), jnp.float32)
    bw = bw.at[0, :H].set(b1.astype(jnp.float32))
    bw = bw.at[1, :H].set(w2.reshape(-1).astype(jnp.float32))
    b2s = b2.reshape(1).astype(jnp.float32)
    return w1t, bw, b2s


def neural_net_forward(x, w1t, bw, b2s, *, block_rows=8192):
    """x: (B, D) f32; prepared params from prepare_params().  Returns (B, 1)."""
    B, D = x.shape
    Hp = w1t.shape[1]

    # Row tile: as large as block_rows, but no larger than ~half the batch
    # (sublane-aligned) so the grid has >= 2 steps for v7x's two TensorCores.
    tB = max(8, min(block_rows, _round_up(pl.cdiv(B, 2), 8)))
    grid = (pl.cdiv(B, tB),)

    out = pl.pallas_call(
        mlp_kernel,
        out_shape=jax.ShapeDtypeStruct((B, 1), jnp.float32),
        grid=grid,
        in_specs=[
            pl.BlockSpec((tB, D), lambda i: (i, 0)),     # x row tile (double-buffered)
            pl.BlockSpec((D, Hp), lambda i: (0, 0)),     # W1^T (resident in VMEM)
            pl.BlockSpec((2, Hp), lambda i: (0, 0)),     # fused [b1; w2] (resident)
            pl.BlockSpec(memory_space=pltpu.SMEM),       # b2 scalar
        ],
        out_specs=pl.BlockSpec((tB, 1), lambda i: (i, 0)),
        compiler_params=pltpu.CompilerParams(
            dimension_semantics=("parallel",)),          # v7x: shard rows over 2 TCs
    )(x, w1t, bw, b2s)
    return out


def init_params(key, input_size, hidden_size):
    # Mimic PyTorch nn.Linear default init (uniform +/- 1/sqrt(fan_in)).
    k1, k2, k3, k4 = jax.random.split(key, 4)
    bound1 = 1.0 / jnp.sqrt(input_size)
    w1 = jax.random.uniform(k1, (hidden_size, input_size), jnp.float32, -bound1, bound1)
    b1 = jax.random.uniform(k2, (hidden_size,), jnp.float32, -bound1, bound1)
    bound2 = 1.0 / jnp.sqrt(hidden_size)
    w2 = jax.random.uniform(k3, (1, hidden_size), jnp.float32, -bound2, bound2)
    b2 = jax.random.uniform(k4, (1,), jnp.float32, -bound2, bound2)
    return w1, b1, w2, b2


if __name__ == "__main__":
    input_size = 32      # stand-in for the dataframe feature count
    hidden_size = 100    # as in the PyTorch module

    key = jax.random.PRNGKey(0)
    kx, kp = jax.random.split(key)
    w1, b1, w2, b2 = init_params(kp, input_size, hidden_size)
    w1t, bw, b2s = prepare_params(w1, b1, w2, b2)

    def ref_fn(xv):
        # Pure-JAX reference (unpadded weights, PyTorch-layout math).
        return jnp.maximum(xv @ w1.T + b1, 0.0) @ w2.T + b2

    # Aligned batch: exercises a 2-step grid (both v7x TCs get work).
    x16 = jax.random.normal(kx, (16, input_size), jnp.float32)
    out16 = jax.block_until_ready(neural_net_forward(x16, w1t, bw, b2s))
    assert out16.shape == (16, 1)
    assert jnp.allclose(out16, ref_fn(x16), atol=1e-5, rtol=1e-5)

    # Ragged batch: exercises the masked last block (no wrapper-side pad pass).
    x13 = x16[:13]
    out13 = jax.block_until_ready(neural_net_forward(x13, w1t, bw, b2s))
    assert out13.shape == (13, 1)
    assert jnp.allclose(out13, ref_fn(x13), atol=1e-5, rtol=1e-5)

    print("KERNEL_OK")
</pallas_src>

<mosaic_0001>
module attributes {stable_mosaic.version = 11 : i64} {
  func.func @mlp_kernel(%arg0: i32, %arg1: memref<8x32xf32, #tpu.memory_space<vmem>>, %arg2: memref<32x128xf32, #tpu.memory_space<vmem>>, %arg3: memref<2x128xf32, #tpu.memory_space<vmem>>, %arg4: memref<1xf32, #tpu.memory_space<smem>>, %arg5: memref<8x1xf32, #tpu.memory_space<vmem>>) attributes {dimension_semantics = [#tpu.dimension_semantics<parallel>], iteration_bounds = array<i64: 2>, scalar_prefetch = 0 : i64, scratch_operands = 0 : i64, tpu.core_type = #tpu.core_type<tc>, window_params = [{transform_indices = @transform_0, window_bounds = array<i64: 8, 32>}, {pipeline_mode = #tpu.pipeline_mode<synchronous>, transform_indices = @transform_1, window_bounds = array<i64: 32, 128>}, {pipeline_mode = #tpu.pipeline_mode<synchronous>, transform_indices = @transform_2, window_bounds = array<i64: 2, 128>}, {transform_indices = @transform_3, window_bounds = array<i64: 1>}, {transform_indices = @transform_4, window_bounds = array<i64: 8, 1>}]} {
    %c0 = arith.constant 0 : index
    %c0_0 = arith.constant 0 : index
    %0 = vector.load %arg1[%c0, %c0_0] : memref<8x32xf32, #tpu.memory_space<vmem>>, vector<8x32xf32>
    %c0_1 = arith.constant 0 : index
    %c0_2 = arith.constant 0 : index
    %1 = vector.load %arg2[%c0_1, %c0_2] : memref<32x128xf32, #tpu.memory_space<vmem>>, vector<32x128xf32>
    %cst = arith.constant dense<0.000000e+00> : vector<8x128xf32>
    %2 = tpu.matmul %0, %1, %cst {dimension_numbers = #tpu.dot_dimension_numbers<[1], [0], [0], [1], [0, 0, 1, 1], [], []>} : vector<8x32xf32>, vector<32x128xf32>, vector<8x128xf32> -> vector<8x128xf32>
    %c0_3 = arith.constant 0 : index
    %c0_4 = arith.constant 0 : index
    %3 = vector.load %arg3[%c0_3, %c0_4] : memref<2x128xf32, #tpu.memory_space<vmem>>, vector<2x128xf32>
    %4 = vector.extract_strided_slice %3 {offsets = [0, 0], sizes = [1, 128], strides = [1, 1]} : vector<2x128xf32> to vector<1x128xf32>
    %5 = vector.broadcast %4 : vector<1x128xf32> to vector<8x128xf32>
    %6 = arith.addf %2, %5 : vector<8x128xf32>
    %cst_5 = arith.constant 0.000000e+00 : f32
    %7 = vector.broadcast %cst_5 : f32 to vector<8x128xf32>
    %8 = arith.maximumf %6, %7 : vector<8x128xf32>
    %9 = vector.extract_strided_slice %3 {offsets = [1, 0], sizes = [1, 128], strides = [1, 1]} : vector<2x128xf32> to vector<1x128xf32>
    %10 = vector.broadcast %9 : vector<1x128xf32> to vector<8x128xf32>
    %11 = arith.mulf %8, %10 : vector<8x128xf32>
    %cst_6 = arith.constant dense<0.000000e+00> : vector<8xf32>
    %12 = vector.multi_reduction <add>, %11, %cst_6 [1] : vector<8x128xf32> to vector<8xf32>
    %13 = vector.shape_cast %12 : vector<8xf32> to vector<8x1xf32>
    %c0_7 = arith.constant 0 : index
    %14 = memref.load %arg4[%c0_7] : memref<1xf32, #tpu.memory_space<smem>>
    %15 = vector.broadcast %14 : f32 to vector<8x1xf32>
    %16 = arith.addf %13, %15 : vector<8x1xf32>
    %c0_8 = arith.constant 0 : index
    %c0_9 = arith.constant 0 : index
    %17 = vector.load %arg5[%c0_8, %c0_9] : memref<8x1xf32, #tpu.memory_space<vmem>>, vector<8x1xf32>
    tpu.vector_store %arg5[%c0_8, %c0_9], %16 {strides = array<i32>} : memref<8x1xf32, #tpu.memory_space<vmem>>, vector<8x1xf32>,
    return
  }
  func.func @transform_0(%arg0: i32) -> (i32, i32) {
    %c0_i32 = arith.constant 0 : i32
    %c0_i32_0 = arith.constant 0 : i32
    return %arg0, %c0_i32 : i32, i32
  }
  func.func @transform_1(%arg0: i32) -> (i32, i32) {
    %c0_i32 = arith.constant 0 : i32
    %c0_i32_0 = arith.constant 0 : i32
    %c0_i32_1 = arith.constant 0 : i32
    return %c0_i32, %c0_i32_0 : i32, i32
  }
  func.func @transform_2(%arg0: i32) -> (i32, i32) {
    %c0_i32 = arith.constant 0 : i32
    %c0_i32_0 = arith.constant 0 : i32
    %c0_i32_1 = arith.constant 0 : i32
    return %c0_i32, %c0_i32_0 : i32, i32
  }
  func.func @transform_3(%arg0: i32) -> i32 {
    %c0_i32 = arith.constant 0 : i32
    %c0_i32_0 = arith.constant 0 : i32
    return %c0_i32 : i32
  }
  func.func @transform_4(%arg0: i32) -> (i32, i32) {
    %c0_i32 = arith.constant 0 : i32
    %c0_i32_0 = arith.constant 0 : i32
    return %arg0, %c0_i32 : i32, i32
  }
}

</mosaic_0001>

<llo_original>
// kernel: tpu_custom_call.1
$region0: #{tpu_custom_call.1}
  #allocation0 [shape = 'u32[]', space=smem, size = 0x4, offset = 0x4, fixed_abs, tag = 'smem constant byte address 0x4 - core index']
  #allocation1 [shape = 'u32[144,128]{1,0:T(1,128)}', space=vmem, size = 0x12000, scoped, tag = 'internal scratch']
  #allocation2 [shape = 'f32[1]{0:T(128)S(6)}', space=smem, size = 0x200, scoped, tag = 'scoped memory for tpu_custom_call.1']
  %s0 = inlined_call_operand.hbm [shape: f32[16,32], index: 0, kind: input, shape index: {}]
  %s1 = inlined_call_operand.hbm [shape: f32[32,128], index: 1, kind: input, shape index: {}]
  %s2 = inlined_call_operand.vmem [shape: f32[2,128], index: 2, kind: input, shape index: {}]
  %s3 = inlined_call_operand.<no memory space> [shape: f32[1], index: 3, kind: input, shape index: {}]
  %s4 = inlined_call_operand.vmem [shape: f32[16,1], index: 4, kind: output, shape index: {}]
  %s5 = sld [smem:[#allocation0]]
  $region57: #{tpu_custom_call.1} parent=0
    _
  %s7 = ssub.s32 1, %s5
  %s8 = scalar_select 0, %s7, %s5
  %9 = sst [smem:[#allocation2]] %s3
  $region1: #{tpu_custom_call.1} parent=0
    #allocation3 [shape = 'u8[8192]{0}', space=vmem, size = 0x2000, scoped, tag = 'input window, operand 0']
    #allocation4 [shape = 's32[2]{0}', space=sflag, size = 0x8, scoped, tag = 'scoped memory for tpu_custom_call.1']
    #allocation5 [shape = 'u8[16384]{0}', space=vmem, size = 0x4000, scoped, tag = 'input window, operand 1, single buffered']
    #allocation6 [shape = 's32[1]{0}', space=sflag, size = 0x4, scoped, tag = 'scoped memory for tpu_custom_call.1']
    %10 = vsyncpa [#allocation4], 0
    %s11 = scalar_lea.sflag [#allocation4], 1
    %12 = vsyncpa %s11, 0
    %13 = vsyncpa [#allocation6], 0
    loop: start=0, step=1, limit=4
    $region2: #{tpu_custom_call.1} parent=1 // loop_pre_header
      _
    $region3: #{tpu_custom_call.1} parent=1 // loop_header
      %s15 = sphi 0, %s19
      %p16 = scmp.ge.s32.totalorder %s15, 4
      %s25 = sphi 0, %s27
      %s28 = sphi 0, %s25
      %s29 = sphi 0, %s28
      %s45 = sphi 0, %s29
      %s49 = sphi 0, %s49
      %s51 = sphi 0, %s49
      %s52 = sphi 0, %s51
      %s66 = sphi 0, %s52
      %s70 = sphi 0, %s70
      %s72 = sphi 0, %s70
      %s73 = sphi 0, %s72
      %s87 = sphi 0, %s73
      %s91 = sphi 0, %s91
      %s93 = sphi 0, %s91
      %s94 = sphi 0, %s93
      %s108 = sphi 0, %s94
      %s114 = sphi 0, %s116
      %s117 = sphi 0, %s114
      %s118 = sphi 0, %s117
      %s134 = sphi 0, %s118
    $region4: #{tpu_custom_call.1} parent=1 // loop_header_branch
      %18 = sbr.rel (%p16) target = $region8
    $region5: #{tpu_custom_call.1} parent=1 // loop_body
      %s20 = ssub.s32 %s15, 1
      %s21 = ssub.s32 %s15, 2
      %s22 = sadd.s32 %s15, 1
      %s23 = ssub.s32 %s15, %s22
      %p24 = scmp.eq.s32.totalorder %s23, 0
      %s26 = sadd.s32 %s25, 1
      %s27 = scalar_select %p24, %s25, %s26
      %p30 = pneg %p24
      %p31 = scmp.eq.s32.totalorder %s15, 1
      %p32 = por %p30, %p31
      %p33 = scmp.ne.s32.totalorder %s25, %s28
      %p34 = scmp.eq.s32.totalorder %s15, 0
      %p35 = por %p33, %p34
      %p36 = scmp.ne.s32.totalorder %s25, %s28
      %p37 = scmp.eq.s32.totalorder %s20, 1
      %p38 = por %p36, %p37
      %p39 = scmp.ne.s32.totalorder %s28, %s29
      %p40 = scmp.eq.s32.totalorder %s20, 0
      %p41 = por %p39, %p40
      %p42 = scmp.ne.s32.totalorder %s28, %s29
      %p43 = scmp.eq.s32.totalorder %s21, 1
      %p44 = por %p42, %p43
      %p46 = scmp.ne.s32.totalorder %s29, %s45
      %p47 = scmp.eq.s32.totalorder %s21, 0
      %p48 = por %p46, %p47
      %s50 = sadd.s32 %s49, 1
      %p53 = scmp.eq.s32.totalorder %s15, 1
      %p54 = scmp.ne.s32.totalorder %s49, %s51
      %p55 = scmp.eq.s32.totalorder %s15, 0
      %p56 = por %p54, %p55
      %p57 = scmp.ne.s32.totalorder %s49, %s51
      %p58 = scmp.eq.s32.totalorder %s20, 1
      %p59 = por %p57, %p58
      %p60 = scmp.ne.s32.totalorder %s51, %s52
      %p61 = scmp.eq.s32.totalorder %s20, 0
      %p62 = por %p60, %p61
      %p63 = scmp.ne.s32.totalorder %s51, %s52
      %p64 = scmp.eq.s32.totalorder %s21, 1
      %p65 = por %p63, %p64
      %p67 = scmp.ne.s32.totalorder %s52, %s66
      %p68 = scmp.eq.s32.totalorder %s21, 0
      %p69 = por %p67, %p68
      %s71 = sadd.s32 %s70, 1
      %p74 = scmp.eq.s32.totalorder %s15, 1
      %p75 = scmp.ne.s32.totalorder %s70, %s72
      %p76 = scmp.eq.s32.totalorder %s15, 0
      %p77 = por %p75, %p76
      %p78 = scmp.ne.s32.totalorder %s70, %s72
      %p79 = scmp.eq.s32.totalorder %s20, 1
      %p80 = por %p78, %p79
      %p81 = scmp.ne.s32.totalorder %s72, %s73
      %p82 = scmp.eq.s32.totalorder %s20, 0
      %p83 = por %p81, %p82
      %p84 = scmp.ne.s32.totalorder %s72, %s73
      %p85 = scmp.eq.s32.totalorder %s21, 1
      %p86 = por %p84, %p85
      %p88 = scmp.ne.s32.totalorder %s73, %s87
      %p89 = scmp.eq.s32.totalorder %s21, 0
      %p90 = por %p88, %p89
      %s92 = sadd.s32 %s91, 1
      %p95 = scmp.eq.s32.totalorder %s15, 1
      %p96 = scmp.ne.s32.totalorder %s91, %s93
      %p97 = scmp.eq.s32.totalorder %s15, 0
      %p98 = por %p96, %p97
      %p99 = scmp.ne.s32.totalorder %s91, %s93
      %p100 = scmp.eq.s32.totalorder %s20, 1
      %p101 = por %p99, %p100
      %p102 = scmp.ne.s32.totalorder %s93, %s94
      %p103 = scmp.eq.s32.totalorder %s20, 0
      %p104 = por %p102, %p103
      %p105 = scmp.ne.s32.totalorder %s93, %s94
      %p106 = scmp.eq.s32.totalorder %s21, 1
      %p107 = por %p105, %p106
      %p109 = scmp.ne.s32.totalorder %s94, %s108
      %p110 = scmp.eq.s32.totalorder %s21, 0
      %p111 = por %p109, %p110
      %s112 = ssub.s32 %s15, %s22
      %p113 = scmp.eq.s32.totalorder %s112, 0
      %s115 = sadd.s32 %s114, 1
      %s116 = scalar_select %p113, %s114, %s115
      %p119 = pneg %p113
      %p120 = scmp.eq.s32.totalorder %s15, 1
      %p121 = por %p119, %p120
      %p122 = scmp.ne.s32.totalorder %s114, %s117
      %p123 = scmp.eq.s32.totalorder %s15, 0
      %p124 = por %p122, %p123
      %p125 = scmp.ne.s32.totalorder %s114, %s117
      %p126 = scmp.eq.s32.totalorder %s20, 1
      %p127 = por %p125, %p126
      %p128 = scmp.ne.s32.totalorder %s117, %s118
      %p129 = scmp.eq.s32.totalorder %s20, 0
      %p130 = por %p128, %p129
      %p131 = scmp.ne.s32.totalorder %s117, %s118
      %p132 = scmp.eq.s32.totalorder %s21, 1
      %p133 = por %p131, %p132
      %p135 = scmp.ne.s32.totalorder %s118, %s134
      %p136 = scmp.eq.s32.totalorder %s21, 0
      %p137 = por %p135, %p136
      %p138 = scmp.le.s32.totalorder 1, %s15
      %p139 = scmp.lt.s32.totalorder %s15, 3
      %p140 = pnand %p138, %p139
      %p141 = pneg %p140
      // Predicated region
      $region9: #{tpu_custom_call.1} parent=5 // pred_check
        _
      $region10: #{tpu_custom_call.1} parent=5 // pred_check_branch
        %143 = sbr.rel (%p140) target = $region12
      $region11: #{tpu_custom_call.1} parent=5 // pred_region
        %s144 = ssub.s32 %s15, 1
        // Predicated region
        $region13: #{tpu_custom_call.1} parent=11 // pred_check
          %p145 = pneg %p62
        $region14: #{tpu_custom_call.1} parent=11 // pred_check_branch
          %147 = sbr.rel (%p145) target = $region16
        $region15: #{tpu_custom_call.1} parent=11 // pred_region
          %s149 = ssub.s32 512, 512
          %150 = vsyncadd [#allocation6], %s149
          %s151 = sshll.u32 [#allocation5], 4
          %s152 = int_to_ptr.vmem [resolvable:$true] %s151
          %157 = dma.hbm_to_vmem [thread:$0]  %s1, 512, %s152, [#allocation6], 128, 128, 8
        $region16: #{tpu_custom_call.1} parent=11 // pred_fallthru
          _
        // Predicated region
        $region17: #{tpu_custom_call.1} parent=11 // pred_check
          %p158 = pneg %p83
        $region18: #{tpu_custom_call.1} parent=11 // pred_check_branch
          %160 = sbr.rel (%p158) target = $region20
        $region19: #{tpu_custom_call.1} parent=11 // pred_region
          _
        $region20: #{tpu_custom_call.1} parent=11 // pred_fallthru
          _
        // Predicated region
        $region21: #{tpu_custom_call.1} parent=11 // pred_check
          %p161 = pneg %p104
        $region22: #{tpu_custom_call.1} parent=11 // pred_check_branch
          %163 = sbr.rel (%p161) target = $region24
        $region23: #{tpu_custom_call.1} parent=11 // pred_region
          _
        $region24: #{tpu_custom_call.1} parent=11 // pred_fallthru
          _
      $region12: #{tpu_custom_call.1} parent=5 // pred_fallthru
        _
      %p164 = scmp.lt.s32.totalorder %s15, 2
      // Predicated region
      $region25: #{tpu_custom_call.1} parent=5 // pred_check
        %p165 = pneg %p164
      $region26: #{tpu_custom_call.1} parent=5 // pred_check_branch
        %167 = sbr.rel (%p165) target = $region28
      $region27: #{tpu_custom_call.1} parent=5 // pred_region
        // Predicated region
        $region29: #{tpu_custom_call.1} parent=27 // pred_check
          %p168 = pneg %p35
        $region30: #{tpu_custom_call.1} parent=27 // pred_check_branch
          %170 = sbr.rel (%p168) target = $region32
        $region31: #{tpu_custom_call.1} parent=27 // pred_region
          %s171 = sand.u32 %s25, 1
          %s172 = scalar_lea.sflag [#allocation4], %s171
          %s173 = sand.u32 %s25, 1
          %s174 = smul.addr %s173, 8
          %s175 = scalar_lea.vmem [#allocation3], %s174
          %s177 = ssub.s32 128, 128
          %178 = vsyncadd %s172, %s177
          %s179 = smul.addr %s15, 128
          %s180 = scalar_lea.hbm %s0, %s179
          %s182 = sshll.u32 %s175, 4
          %s183 = int_to_ptr.vmem [resolvable:$true] %s182
          %185 = dma.hbm_to_vmem [thread:$0]  %s180, 128, %s183, %s172
        $region32: #{tpu_custom_call.1} parent=27 // pred_fallthru
          _
      $region28: #{tpu_custom_call.1} parent=5 // pred_fallthru
        _
      %p186 = scmp.le.s32.totalorder 1, %s15
      %p187 = scmp.lt.s32.totalorder %s15, 3
      %p188 = pnand %p186, %p187
      %p189 = pneg %p188
      // Predicated region
      $region33: #{tpu_custom_call.1} parent=5 // pred_check
        _
      $region34: #{tpu_custom_call.1} parent=5 // pred_check_branch
        %191 = sbr.rel (%p188) target = $region36
      $region35: #{tpu_custom_call.1} parent=5 // pred_region
        %s192 = ssub.s32 %s15, 1
        %s193 = sand.u32 %s28, 1
        %s194 = scalar_lea.sflag [#allocation4], %s193
        %s195 = sand.u32 %s28, 1
        %s196 = smul.addr %s195, 8
        %s197 = scalar_lea.vmem [#allocation3], %s196
        // Predicated region
        $region37: #{tpu_custom_call.1} parent=35 // pred_check
          %p198 = pneg %p41
        $region38: #{tpu_custom_call.1} parent=35 // pred_check_branch
          %200 = sbr.rel (%p198) target = $region40
        $region39: #{tpu_custom_call.1} parent=35 // pred_region
          %201 = dma.done %s194, 128
        $region40: #{tpu_custom_call.1} parent=35 // pred_fallthru
          _
        // Predicated region
        $region41: #{tpu_custom_call.1} parent=35 // pred_check
          %p202 = pneg %p62
        $region42: #{tpu_custom_call.1} parent=35 // pred_check_branch
          %204 = sbr.rel (%p202) target = $region44
        $region43: #{tpu_custom_call.1} parent=35 // pred_region
          %205 = dma.done [#allocation6], 512
        $region44: #{tpu_custom_call.1} parent=35 // pred_fallthru
          _
        %s206 = sand.u32 %s28, 1
        %s207 = scalar_lea.sflag [#allocation4], %s206
        %s208 = sand.u32 %s28, 1
        %s209 = smul.addr %s208, 8
        %s210 = scalar_lea.vmem [#allocation3], %s209
        %p211 = pneg %p41
        %p212 = pneg %p38
        %p213 = pneg %p62
        %p214 = pneg %p59
        %p215 = pneg %p83
        %p216 = pneg %p80
        %p217 = pneg %p104
        %p218 = pneg %p101
        %p219 = pneg %p130
        %p220 = pneg %p127
        %p221 = scmp.lt.s32.totalorder %s20, 1
        %s222 = scalar_select %p221, %s20, 1
        %s223 = smul.addr %s222, 8
        %s224 = scalar_lea.vmem %s4, %s223
        %p225 = scmp.lt.s32.totalorder %s20, 1
        %s226 = scalar_select %p225, %s20, 1
        %s227 = smul.addr %s226, 8
        %s228 = scalar_lea.vmem %s4, %s227
        %v229 = vld [vmem:[%s197] sm:$0xff]
        %v230 = vld [vmem:[#allocation5] sm:$0xff]
        %v231 = vld [vmem:[#allocation5 + $0x8] sm:$0xff]
        %v232 = vld [vmem:[#allocation5 + $0x10] sm:$0xff]
        %v233 = vld [vmem:[#allocation5 + $0x18] sm:$0xff]
        %v234 = vld [vmem:[%s2] sm:$0x3]
        %v235 = vlaneseq
        %v236 = vshrl.u32 %v235, 7
        %v237 = vsub.s32 0, %v236
        %v238 = vrot.slane %v234, %v237
        %vm239 = vcmask 261120
        %v241 = vsel %vm239, %v229, 0
        %243 = vmatprep.subr.mxu0 0.0
        %244 = vmatpush1.msra.mxu0 %v230
        %245 = vmatprep.subr.mxu0 0.0
        %246 = vmatpush1.msra.mxu0 %v231
        %247 = vmatprep.subr.mxu0 0.0
        %248 = vmatpush1.msra.mxu0 %v232
        %249 = vmatprep.subr.mxu0 0.0
        %250 = vmatpush1.msra.mxu0 %v233
        %251 = vmatprep.subr.mxu0 0.0
        %252 = vmatpush1.msra.mxu0 0.0
        %253 = vmatprep.subr.mxu0 0.0
        %254 = vmatpush1.msra.mxu0 0.0
        %255 = vmatprep.subr.mxu0 0.0
        %256 = vmatpush1.msra.mxu0 0.0
        %257 = vmatprep.subr.mxu0 0.0
        %258 = vmatpush1.msra.mxu0 0.0
        %259 = vmatprep.subr.mxu0 0.0
        %260 = vmatpush1.msra.mxu0 0.0
        %261 = vmatprep.subr.mxu0 0.0
        %262 = vmatpush1.msra.mxu0 0.0
        %263 = vmatprep.subr.mxu0 0.0
        %264 = vmatpush1.msra.mxu0 0.0
        %265 = vmatprep.subr.mxu0 0.0
        %266 = vmatpush1.msra.mxu0 0.0
        %267 = vmatprep.subr.mxu0 0.0
        %268 = vmatpush1.msra.mxu0 0.0
        %269 = vmatprep.subr.mxu0 0.0
        %270 = vmatpush1.msra.mxu0 0.0
        %271 = vmatprep.subr.mxu0 0.0
        %272 = vmatpush1.msra.mxu0 0.0
        %273 = vmatprep.subr.mxu0 0.0
        %274 = vmatpush1.msra.mxu0 0.0
        %275 = vmatprep.subr.mxu0 0.0
        %276 = vmatpush1.msra.mxu0 0.0
        %277 = vmatprep.subr.mxu0 0.0
        %278 = vmatpush1.msra.mxu0 0.0
        %279 = vmatprep.subr.mxu0 0.0
        %280 = vmatpush1.msra.mxu0 0.0
        %281 = vmatprep.subr.mxu0 0.0
        %282 = vmatpush1.msra.mxu0 0.0
        %283 = vmatprep.subr.mxu0 0.0
        %284 = vmatpush1.msra.mxu0 0.0
        %285 = vmatprep.subr.mxu0 0.0
        %286 = vmatpush1.msra.mxu0 0.0
        %287 = vmatprep.subr.mxu0 0.0
        %288 = vmatpush1.msra.mxu0 0.0
        %289 = vmatprep.subr.mxu0 0.0
        %290 = vmatpush1.msra.mxu0 0.0
        %291 = vmatprep.subr.mxu0 0.0
        %292 = vmatpush1.msra.mxu0 0.0
        %293 = vmatprep.subr.mxu0 0.0
        %294 = vmatpush1.msra.mxu0 0.0
        %295 = vmatprep.subr.mxu0 0.0
        %296 = vmatpush1.msra.mxu0 0.0
        %297 = vmatprep.subr.mxu0 0.0
        %298 = vmatpush1.msra.mxu0 0.0
        %299 = vmatprep.subr.mxu0 0.0
        %300 = vmatpush1.msra.mxu0 0.0
        %301 = vmatprep.subr.mxu0 0.0
        %302 = vmatpush1.msra.mxu0 0.0
        %303 = vmatprep.subr.mxu0 0.0
        %304 = vmatpush1.msra.mxu0 0.0
        %305 = vmatprep.subr.mxu0 0.0
        %306 = vmatpush1.msra.mxu0 0.0
        %307 = vmatprep.mubr.f32.mxu0 0.0
        %308 = vmatmul.mubr.f32.gmra.mrb[0].mxu0 %v241
        %v309 = vpop.f32.mrb[0].mxu0
        %v310 = vadd.f32 %v238, %v309
        %v311 = vpop.f32.mrb[0].mxu0
        %312 = vdwg.mxu0
        %v313 = vmax.f32 %v310, 0.0
        %v314 = vlaneseq
        %v315 = vshrl.u32 %v314, 7
        %v316 = vsub.s32 1, %v315
        %v317 = vrot.slane %v234, %v316
        %v318 = vmul.f32 %v313, %v317
        %319 = vadd.xlane.f32.xlu0 %v318
        %v320 = vpop.xlane.xlu0 %319
        %s321 = sld [smem:[#allocation2]]
        %v322 = vstv %s321
        %v323 = vadd.f32 %v320, %v322
        %vm324 = vcmask 7168
        %325 = vst.msk [vmem:[%s228] sm:$0xff] %vm324, %v323
        %p326 = scmp.lt.s32.totalorder %s20, 1
        %s327 = scalar_select %p326, %s20, 1
        %s328 = smul.addr %s327, 8
        %s329 = scalar_lea.vmem %s4, %s328
        // Predicated region
        $region45: #{tpu_custom_call.1} parent=35 // pred_check
          %p330 = pneg %p127
        $region46: #{tpu_custom_call.1} parent=35 // pred_check_branch
          %332 = sbr.rel (%p330) target = $region48
        $region47: #{tpu_custom_call.1} parent=35 // pred_region
          _
        $region48: #{tpu_custom_call.1} parent=35 // pred_fallthru
          _
      $region36: #{tpu_custom_call.1} parent=5 // pred_fallthru
        _
      %p333 = scmp.le.s32.totalorder 2, %s15
      // Predicated region
      $region49: #{tpu_custom_call.1} parent=5 // pred_check
        %p334 = pneg %p333
      $region50: #{tpu_custom_call.1} parent=5 // pred_check_branch
        %336 = sbr.rel (%p334) target = $region52
      $region51: #{tpu_custom_call.1} parent=5 // pred_region
        %s337 = ssub.s32 %s15, 2
        // Predicated region
        $region53: #{tpu_custom_call.1} parent=51 // pred_check
          %p338 = pneg %p133
        $region54: #{tpu_custom_call.1} parent=51 // pred_check_branch
          %340 = sbr.rel (%p338) target = $region56
        $region55: #{tpu_custom_call.1} parent=51 // pred_region
          %p341 = scmp.lt.s32.totalorder %s21, 1
          %s342 = scalar_select %p341, %s21, 1
          %s343 = smul.addr %s342, 8
          %s344 = scalar_lea.vmem %s4, %s343
        $region56: #{tpu_custom_call.1} parent=51 // pred_fallthru
          _
      $region52: #{tpu_custom_call.1} parent=5 // pred_fallthru
        _
    $region6: #{tpu_custom_call.1} parent=1 // loop_footer
      %s19 = sadd.s32 1, %s15
    $region7: #{tpu_custom_call.1} parent=1 // loop_footer_branch
      %14 = sbr.rel target = $region3
    $region8: #{tpu_custom_call.1} parent=1 // loop_exit
      _
    %345 = vsyncpa [#allocation4], 1
    %s346 = scalar_lea.sflag [#allocation4], 1
    %347 = vsyncpa %s346, 1
    %348 = vsyncpa [#allocation6], 1

</llo_original>
